<compile_context>
chip_gen: v6e
topology: v6e:2x2x1
jax: 0.10.0
libtpu: 0.0.40
codegen_flags: <defaults>
</compile_context>

<pallas_src>
import math
import functools

import jax
import jax.numpy as jnp
from jax.experimental import pallas as pl
from jax.experimental.pallas import tpu as pltpu


def _layer_norm(v, w, b, eps=1e-5):
    mu = jnp.mean(v, axis=-1, keepdims=True)
    var = jnp.mean((v - mu) ** 2, axis=-1, keepdims=True)
    return (v - mu) * jax.lax.rsqrt(var + eps) * w + b


def transformer_block_kernel(
    x_ref,       # (1, L, E) f32  -- one batch element (batch-major layout)
    vecs_ref,    # (8, W)   f32  -- packed LN weights / biases (one DMA)
    wqkv_ref,    # (E, 3E)  bf16
    wo_ref,      # (E, E)   bf16
    w1_ref,      # (E, 4E)  bf16
    w2_ref,      # (4E, E)  bf16
    o_ref,       # (1, L, E) f32
    *, n_head,
):
    _, L, E = x_ref.shape
    H = n_head
    Dh = E // H
    scale = 1.0 / math.sqrt(Dh)

    x = x_ref[0]                                   # (L, E) f32

    # --- packed per-channel vectors (static slices of the single slab) ---
    ln1_w = vecs_ref[0:1, :E]
    ln1_b = vecs_ref[1:2, :E]
    bqkv = vecs_ref[2:3, :3 * E]
    bo = vecs_ref[3:4, :E]
    ln2_w = vecs_ref[4:5, :E]
    ln2_b = vecs_ref[5:6, :E]
    b1 = vecs_ref[6:7, :4 * E]
    b2 = vecs_ref[7:8, :E]

    # ---- LN1 (f32 VPU) ----
    lx = _layer_norm(x, ln1_w, ln1_b)

    # ---- fused QKV projection: ONE (L,E)x(E,3E) MXU pass, f32 accumulate ----
    qkv = jnp.dot(lx.astype(jnp.bfloat16), wqkv_ref[...],
                  preferred_element_type=jnp.float32) + bqkv        # (L, 3E)

    q = qkv[:, :E] * scale
    k = qkv[:, E:2 * E]
    v = qkv[:, 2 * E:]

    # Layout-only head split: static lane slices + major-axis concat.
    # (All matmuls below remain head-batched on the MXU.)
    def split_heads(t):                            # (L, E) -> (H, L, Dh)
        return jnp.concatenate(
            [t[:, h * Dh:(h + 1) * Dh][None] for h in range(H)], axis=0)

    qh = split_heads(q).astype(jnp.bfloat16)
    kh = split_heads(k).astype(jnp.bfloat16)
    vh = split_heads(v).astype(jnp.bfloat16)

    # ---- scores + softmax (per head, within this batch element; f32 math) ----
    s = jnp.einsum("hld,hmd->hlm", qh, kh,
                   preferred_element_type=jnp.float32)              # (H, L, L)
    s = s - jnp.max(s, axis=-1, keepdims=True)
    p = jnp.exp(s)
    p = p * pl.reciprocal(jnp.sum(p, axis=-1, keepdims=True), approx=True)

    # ---- context, head concat, output projection (head-sum rides MXU K) ----
    ctx = jnp.einsum("hlm,hmd->hld", p.astype(jnp.bfloat16), vh,
                     preferred_element_type=jnp.float32)            # (H, L, Dh)
    attn = jnp.concatenate([ctx[h] for h in range(H)], axis=-1)     # (L, E)
    sa = jnp.dot(attn.astype(jnp.bfloat16), wo_ref[...],
                 preferred_element_type=jnp.float32) + bo           # (L, E)

    # ---- residual 1 ----
    x1 = x + sa

    # ---- LN2 + FFN (bf16 MXU, f32 elementwise) ----
    lx2 = _layer_norm(x1, ln2_w, ln2_b)
    h1 = jnp.dot(lx2.astype(jnp.bfloat16), w1_ref[...],
                 preferred_element_type=jnp.float32) + b1
    h1 = jnp.maximum(h1, 0.0)
    ff = jnp.dot(h1.astype(jnp.bfloat16), w2_ref[...],
                 preferred_element_type=jnp.float32) + b2

    # ---- residual 2 (dropout = identity, eval mode) ----
    o_ref[0] = x1 + ff


@functools.partial(jax.jit, static_argnames=("n_head",))
def transformer_block(x, params, n_head):
    """x: (L, N, E) float32  ->  (L, N, E) float32."""
    L, N, E = x.shape
    assert E % n_head == 0

    # batch-major reorder so the batch can be the parallel grid axis
    xb = jnp.transpose(x, (1, 0, 2))               # (N, L, E)

    vecs = params["vecs"]
    wqkv, wo = params["wqkv_t"], params["wo_t"]
    w1, w2 = params["w1_t"], params["w2_t"]

    def const_spec(a):
        nd = a.ndim
        return pl.BlockSpec(a.shape, lambda n, nd=nd: (0,) * nd)

    out = pl.pallas_call(
        functools.partial(transformer_block_kernel, n_head=n_head),
        out_shape=jax.ShapeDtypeStruct((N, L, E), jnp.float32),
        grid=(N,),
        in_specs=[
            pl.BlockSpec((1, L, E), lambda n: (n, 0, 0)),
            const_spec(vecs),
            const_spec(wqkv),
            const_spec(wo),
            const_spec(w1),
            const_spec(w2),
        ],
        out_specs=pl.BlockSpec((1, L, E), lambda n: (n, 0, 0)),
        compiler_params=pltpu.CompilerParams(
            dimension_semantics=("parallel",),
            vmem_limit_bytes=32 * 1024 * 1024),
    )(xb, vecs, wqkv, wo, w1, w2)

    return jnp.transpose(out, (1, 0, 2))           # back to (L, N, E)


def make_params(key, n_embd, n_head):
    E = n_embd
    ks = jax.random.split(key, 8)

    def w(k, shape, s=0.05, dtype=jnp.float32):
        return (s * jax.random.normal(k, shape)).astype(dtype)

    p = {
        # LayerNorm defaults (weight=1, bias=0)
        "ln1_w": jnp.ones((E,), jnp.float32),
        "ln1_b": jnp.zeros((E,), jnp.float32),
        "ln2_w": jnp.ones((E,), jnp.float32),
        "ln2_b": jnp.zeros((E,), jnp.float32),
        # MHA in_proj (pre-transposed (E,3E)) and out_proj ((E,E)) -- bf16 MXU
        "wqkv_t": w(ks[0], (E, 3 * E), dtype=jnp.bfloat16),
        "bqkv":   w(ks[1], (3 * E,), 0.01),
        "wo_t":   w(ks[2], (E, E), dtype=jnp.bfloat16),
        "bo":     w(ks[3], (E,), 0.01),
        # FeedForward: Linear(E,4E) -> ReLU -> Linear(4E,E) -- bf16 MXU
        "w1_t":   w(ks[4], (E, 4 * E), dtype=jnp.bfloat16),
        "b1":     w(ks[5], (4 * E,), 0.01),
        "w2_t":   w(ks[6], (4 * E, E), dtype=jnp.bfloat16),
        "b2":     w(ks[7], (E,), 0.01),
    }

    # Pack all small f32 vectors into one (8, W) slab -> a single kernel input
    # / DMA.  Row layout must match the static slices inside the kernel.
    W = max(128, ((4 * E + 127) // 128) * 128)
    rows = [p["ln1_w"], p["ln1_b"], p["bqkv"], p["bo"],
            p["ln2_w"], p["ln2_b"], p["b1"], p["b2"]]
    vecs = jnp.zeros((8, W), jnp.float32)
    for i, r in enumerate(rows):
        vecs = vecs.at[i, :r.shape[0]].set(r)
    p["vecs"] = vecs
    return p


def reference(x, params, n_head):
    """Pure-JAX f32 reference (bf16 weights upcast, activations f32)."""
    L, N, E = x.shape
    Dh = E // n_head
    scale = 1.0 / math.sqrt(Dh)
    f32 = lambda a: a.astype(jnp.float32)
    wqkv, wo = f32(params["wqkv_t"]), f32(params["wo_t"])
    w1, w2 = f32(params["w1_t"]), f32(params["w2_t"])

    def ln(v, wn, bn):
        mu = jnp.mean(v, -1, keepdims=True)
        var = jnp.mean((v - mu) ** 2, -1, keepdims=True)
        return (v - mu) * jax.lax.rsqrt(var + 1e-5) * wn + bn

    lx = ln(x, params["ln1_w"], params["ln1_b"])
    qkv = lx @ wqkv + params["bqkv"]
    q, k, v = qkv[..., :E], qkv[..., E:2 * E], qkv[..., 2 * E:]
    q = q.reshape(L, N, n_head, Dh) * scale
    k = k.reshape(L, N, n_head, Dh)
    v = v.reshape(L, N, n_head, Dh)
    s = jnp.einsum("lnhd,mnhd->nhlm", q, k)
    p = jax.nn.softmax(s, axis=-1)
    attn = jnp.einsum("nhlm,mnhd->lnhd", p, v).reshape(L, N, E)
    sa = attn @ wo + params["bo"]
    x1 = x + sa
    lx2 = ln(x1, params["ln2_w"], params["ln2_b"])
    h1 = jnp.maximum(lx2 @ w1 + params["b1"], 0.0)
    ff = h1 @ w2 + params["b2"]
    return x1 + ff


if __name__ == "__main__":
    n_embd, n_head = 32, 4
    L, N = 8, 2            # (seq, batch)

    key = jax.random.PRNGKey(0)
    kx, kp = jax.random.split(key)
    x = jax.random.normal(kx, (L, N, n_embd), dtype=jnp.float32)
    params = make_params(kp, n_embd, n_head)

    out = jax.block_until_ready(transformer_block(x, params, n_head=n_head))
    ref = reference(x, params, n_head)

    assert out.shape == (L, N, n_embd)
    max_err = jnp.max(jnp.abs(out - ref))
    assert jnp.allclose(out, ref, rtol=2e-2, atol=2e-2), (
        f"mismatch vs reference (max |err| = {max_err})")

    print("KERNEL_OK")
</pallas_src>

<mosaic_0001>
module attributes {stable_mosaic.version = 11 : i64} {
  func.func @transformer_block_kernel(%arg0: i32, %arg1: memref<1x8x32xf32, #tpu.memory_space<vmem>>, %arg2: memref<8x128xf32, #tpu.memory_space<vmem>>, %arg3: memref<32x96xbf16, #tpu.memory_space<vmem>>, %arg4: memref<32x32xbf16, #tpu.memory_space<vmem>>, %arg5: memref<32x128xbf16, #tpu.memory_space<vmem>>, %arg6: memref<128x32xbf16, #tpu.memory_space<vmem>>, %arg7: memref<1x8x32xf32, #tpu.memory_space<vmem>>) attributes {dimension_semantics = [#tpu.dimension_semantics<parallel>], iteration_bounds = array<i64: 2>, scalar_prefetch = 0 : i64, scratch_operands = 0 : i64, tpu.core_type = #tpu.core_type<tc>, window_params = [{transform_indices = @transform_0, window_bounds = array<i64: 1, 8, 32>}, {pipeline_mode = #tpu.pipeline_mode<synchronous>, transform_indices = @transform_1, window_bounds = array<i64: 8, 128>}, {pipeline_mode = #tpu.pipeline_mode<synchronous>, transform_indices = @transform_2, window_bounds = array<i64: 32, 96>}, {pipeline_mode = #tpu.pipeline_mode<synchronous>, transform_indices = @transform_3, window_bounds = array<i64: 32, 32>}, {pipeline_mode = #tpu.pipeline_mode<synchronous>, transform_indices = @transform_4, window_bounds = array<i64: 32, 128>}, {pipeline_mode = #tpu.pipeline_mode<synchronous>, transform_indices = @transform_5, window_bounds = array<i64: 128, 32>}, {transform_indices = @transform_6, window_bounds = array<i64: 1, 8, 32>}]} {
    %c0 = arith.constant 0 : index
    %c0_0 = arith.constant 0 : index
    %c0_1 = arith.constant 0 : index
    %0 = vector.load %arg1[%c0, %c0_0, %c0_1] : memref<1x8x32xf32, #tpu.memory_space<vmem>>, vector<1x8x32xf32>
    %1 = vector.shape_cast %0 : vector<1x8x32xf32> to vector<8x32xf32>
    %c0_2 = arith.constant 0 : index
    %c0_3 = arith.constant 0 : index
    %2 = vector.load %arg2[%c0_2, %c0_3] : memref<8x128xf32, #tpu.memory_space<vmem>>, vector<1x32xf32>
    %c1 = arith.constant 1 : index
    %c0_4 = arith.constant 0 : index
    %3 = vector.load %arg2[%c1, %c0_4] : memref<8x128xf32, #tpu.memory_space<vmem>>, vector<1x32xf32>
    %c2 = arith.constant 2 : index
    %c0_5 = arith.constant 0 : index
    %4 = vector.load %arg2[%c2, %c0_5] : memref<8x128xf32, #tpu.memory_space<vmem>>, vector<1x96xf32>
    %c3 = arith.constant 3 : index
    %c0_6 = arith.constant 0 : index
    %5 = vector.load %arg2[%c3, %c0_6] : memref<8x128xf32, #tpu.memory_space<vmem>>, vector<1x32xf32>
    %c4 = arith.constant 4 : index
    %c0_7 = arith.constant 0 : index
    %6 = vector.load %arg2[%c4, %c0_7] : memref<8x128xf32, #tpu.memory_space<vmem>>, vector<1x32xf32>
    %c5 = arith.constant 5 : index
    %c0_8 = arith.constant 0 : index
    %7 = vector.load %arg2[%c5, %c0_8] : memref<8x128xf32, #tpu.memory_space<vmem>>, vector<1x32xf32>
    %c6 = arith.constant 6 : index
    %c0_9 = arith.constant 0 : index
    %8 = vector.load %arg2[%c6, %c0_9] : memref<8x128xf32, #tpu.memory_space<vmem>>, vector<1x128xf32>
    %c7 = arith.constant 7 : index
    %c0_10 = arith.constant 0 : index
    %9 = vector.load %arg2[%c7, %c0_10] : memref<8x128xf32, #tpu.memory_space<vmem>>, vector<1x32xf32>
    %cst = arith.constant dense<0.000000e+00> : vector<8xf32>
    %10 = vector.multi_reduction <add>, %1, %cst [1] : vector<8x32xf32> to vector<8xf32>
    %11 = vector.shape_cast %10 : vector<8xf32> to vector<8x1xf32>
    %cst_11 = arith.constant 3.200000e+01 : f32
    %12 = vector.broadcast %cst_11 : f32 to vector<8x1xf32>
    %13 = arith.divf %11, %12 : vector<8x1xf32>
    %14 = vector.broadcast %13 : vector<8x1xf32> to vector<8x32xf32>
    %15 = arith.subf %1, %14 : vector<8x32xf32>
    %16 = arith.mulf %15, %15 : vector<8x32xf32>
    %cst_12 = arith.constant dense<0.000000e+00> : vector<8xf32>
    %17 = vector.multi_reduction <add>, %16, %cst_12 [1] : vector<8x32xf32> to vector<8xf32>
    %18 = vector.shape_cast %17 : vector<8xf32> to vector<8x1xf32>
    %cst_13 = arith.constant 3.200000e+01 : f32
    %19 = vector.broadcast %cst_13 : f32 to vector<8x1xf32>
    %20 = arith.divf %18, %19 : vector<8x1xf32>
    %21 = vector.broadcast %13 : vector<8x1xf32> to vector<8x32xf32>
    %22 = arith.subf %1, %21 : vector<8x32xf32>
    %cst_14 = arith.constant 9.99999974E-6 : f32
    %23 = vector.broadcast %cst_14 : f32 to vector<8x1xf32>
    %24 = arith.addf %20, %23 : vector<8x1xf32>
    %25 = math.rsqrt %24 : vector<8x1xf32>
    %26 = vector.broadcast %25 : vector<8x1xf32> to vector<8x32xf32>
    %27 = arith.mulf %22, %26 : vector<8x32xf32>
    %28 = vector.broadcast %2 : vector<1x32xf32> to vector<8x32xf32>
    %29 = arith.mulf %27, %28 : vector<8x32xf32>
    %30 = vector.broadcast %3 : vector<1x32xf32> to vector<8x32xf32>
    %31 = arith.addf %29, %30 : vector<8x32xf32>
    %32 = arith.truncf %31 : vector<8x32xf32> to vector<8x32xbf16>
    %c0_15 = arith.constant 0 : index
    %c0_16 = arith.constant 0 : index
    %33 = vector.load %arg3[%c0_15, %c0_16] : memref<32x96xbf16, #tpu.memory_space<vmem>>, vector<32x96xbf16>
    %cst_17 = arith.constant dense<0.000000e+00> : vector<8x96xf32>
    %34 = tpu.matmul %32, %33, %cst_17 {dimension_numbers = #tpu.dot_dimension_numbers<[1], [0], [0], [1], [0, 0, 1, 1], [], []>} : vector<8x32xbf16>, vector<32x96xbf16>, vector<8x96xf32> -> vector<8x96xf32>
    %35 = vector.broadcast %4 : vector<1x96xf32> to vector<8x96xf32>
    %36 = arith.addf %34, %35 : vector<8x96xf32>
    %37 = vector.extract_strided_slice %36 {offsets = [0, 0], sizes = [8, 32], strides = [1, 1]} : vector<8x96xf32> to vector<8x32xf32>
    %cst_18 = arith.constant 0.353553385 : f32
    %38 = vector.broadcast %cst_18 : f32 to vector<8x32xf32>
    %39 = arith.mulf %37, %38 : vector<8x32xf32>
    %40 = vector.extract_strided_slice %36 {offsets = [0, 32], sizes = [8, 32], strides = [1, 1]} : vector<8x96xf32> to vector<8x32xf32>
    %41 = vector.extract_strided_slice %36 {offsets = [0, 64], sizes = [8, 32], strides = [1, 1]} : vector<8x96xf32> to vector<8x32xf32>
    %42 = vector.extract_strided_slice %39 {offsets = [0, 0], sizes = [8, 8], strides = [1, 1]} : vector<8x32xf32> to vector<8x8xf32>
    %43 = vector.shape_cast %42 : vector<8x8xf32> to vector<1x8x8xf32>
    %44 = vector.extract_strided_slice %39 {offsets = [0, 8], sizes = [8, 8], strides = [1, 1]} : vector<8x32xf32> to vector<8x8xf32>
    %45 = vector.shape_cast %44 : vector<8x8xf32> to vector<1x8x8xf32>
    %46 = vector.extract_strided_slice %39 {offsets = [0, 16], sizes = [8, 8], strides = [1, 1]} : vector<8x32xf32> to vector<8x8xf32>
    %47 = vector.shape_cast %46 : vector<8x8xf32> to vector<1x8x8xf32>
    %48 = vector.extract_strided_slice %39 {offsets = [0, 24], sizes = [8, 8], strides = [1, 1]} : vector<8x32xf32> to vector<8x8xf32>
    %49 = vector.shape_cast %48 : vector<8x8xf32> to vector<1x8x8xf32>
    %50 = tpu.concatenate %43, %45, %47, %49 in 0 : vector<1x8x8xf32>, vector<1x8x8xf32>, vector<1x8x8xf32>, vector<1x8x8xf32> -> vector<4x8x8xf32>
    %51 = arith.truncf %50 : vector<4x8x8xf32> to vector<4x8x8xbf16>
    %52 = vector.extract_strided_slice %40 {offsets = [0, 0], sizes = [8, 8], strides = [1, 1]} : vector<8x32xf32> to vector<8x8xf32>
    %53 = vector.shape_cast %52 : vector<8x8xf32> to vector<1x8x8xf32>
    %54 = vector.extract_strided_slice %40 {offsets = [0, 8], sizes = [8, 8], strides = [1, 1]} : vector<8x32xf32> to vector<8x8xf32>
    %55 = vector.shape_cast %54 : vector<8x8xf32> to vector<1x8x8xf32>
    %56 = vector.extract_strided_slice %40 {offsets = [0, 16], sizes = [8, 8], strides = [1, 1]} : vector<8x32xf32> to vector<8x8xf32>
    %57 = vector.shape_cast %56 : vector<8x8xf32> to vector<1x8x8xf32>
    %58 = vector.extract_strided_slice %40 {offsets = [0, 24], sizes = [8, 8], strides = [1, 1]} : vector<8x32xf32> to vector<8x8xf32>
    %59 = vector.shape_cast %58 : vector<8x8xf32> to vector<1x8x8xf32>
    %60 = tpu.concatenate %53, %55, %57, %59 in 0 : vector<1x8x8xf32>, vector<1x8x8xf32>, vector<1x8x8xf32>, vector<1x8x8xf32> -> vector<4x8x8xf32>
    %61 = arith.truncf %60 : vector<4x8x8xf32> to vector<4x8x8xbf16>
    %62 = vector.extract_strided_slice %41 {offsets = [0, 0], sizes = [8, 8], strides = [1, 1]} : vector<8x32xf32> to vector<8x8xf32>
    %63 = vector.shape_cast %62 : vector<8x8xf32> to vector<1x8x8xf32>
    %64 = vector.extract_strided_slice %41 {offsets = [0, 8], sizes = [8, 8], strides = [1, 1]} : vector<8x32xf32> to vector<8x8xf32>
    %65 = vector.shape_cast %64 : vector<8x8xf32> to vector<1x8x8xf32>
    %66 = vector.extract_strided_slice %41 {offsets = [0, 16], sizes = [8, 8], strides = [1, 1]} : vector<8x32xf32> to vector<8x8xf32>
    %67 = vector.shape_cast %66 : vector<8x8xf32> to vector<1x8x8xf32>
    %68 = vector.extract_strided_slice %41 {offsets = [0, 24], sizes = [8, 8], strides = [1, 1]} : vector<8x32xf32> to vector<8x8xf32>
    %69 = vector.shape_cast %68 : vector<8x8xf32> to vector<1x8x8xf32>
    %70 = tpu.concatenate %63, %65, %67, %69 in 0 : vector<1x8x8xf32>, vector<1x8x8xf32>, vector<1x8x8xf32>, vector<1x8x8xf32> -> vector<4x8x8xf32>
    %71 = arith.truncf %70 : vector<4x8x8xf32> to vector<4x8x8xbf16>
    "tpu.trace_start"() <{level = 10 : i32, message = "hld,hmd->hlm"}> : () -> ()
    %cst_19 = arith.constant dense<0.000000e+00> : vector<4x8x8xf32>
    %72 = tpu.matmul %51, %61, %cst_19 {dimension_numbers = #tpu.dot_dimension_numbers<[2], [2], [1], [1], [0, 0, 0, 1, 1, 1], [0], [0]>} : vector<4x8x8xbf16>, vector<4x8x8xbf16>, vector<4x8x8xf32> -> vector<4x8x8xf32>
    "tpu.trace_stop"() : () -> ()
    %cst_20 = arith.constant dense<0xFF800000> : vector<4x8xf32>
    %73 = vector.multi_reduction <maximumf>, %72, %cst_20 [2] : vector<4x8x8xf32> to vector<4x8xf32>
    %74 = vector.shape_cast %73 : vector<4x8xf32> to vector<4x8x1xf32>
    %75 = vector.broadcast %74 : vector<4x8x1xf32> to vector<4x8x8xf32>
    %76 = arith.subf %72, %75 : vector<4x8x8xf32>
    %77 = math.exp %76 : vector<4x8x8xf32>
    %cst_21 = arith.constant dense<0.000000e+00> : vector<4x8xf32>
    %78 = vector.multi_reduction <add>, %77, %cst_21 [2] : vector<4x8x8xf32> to vector<4x8xf32>
    %79 = vector.shape_cast %78 : vector<4x8xf32> to vector<4x8x1xf32>
    %80 = tpu.reciprocal %79 {approx = true} : vector<4x8x1xf32> -> vector<4x8x1xf32>
    %81 = vector.broadcast %80 : vector<4x8x1xf32> to vector<4x8x8xf32>
    %82 = arith.mulf %77, %81 : vector<4x8x8xf32>
    %83 = arith.truncf %82 : vector<4x8x8xf32> to vector<4x8x8xbf16>
    "tpu.trace_start"() <{level = 10 : i32, message = "hlm,hmd->hld"}> : () -> ()
    %cst_22 = arith.constant dense<0.000000e+00> : vector<4x8x8xf32>
    %84 = tpu.matmul %83, %71, %cst_22 {dimension_numbers = #tpu.dot_dimension_numbers<[2], [1], [1], [2], [0, 0, 0, 1, 1, 2], [0], [0]>} : vector<4x8x8xbf16>, vector<4x8x8xbf16>, vector<4x8x8xf32> -> vector<4x8x8xf32>
    "tpu.trace_stop"() : () -> ()
    %85 = vector.extract_strided_slice %84 {offsets = [0, 0, 0], sizes = [1, 8, 8], strides = [1, 1, 1]} : vector<4x8x8xf32> to vector<1x8x8xf32>
    %86 = vector.shape_cast %85 : vector<1x8x8xf32> to vector<8x8xf32>
    %87 = vector.extract_strided_slice %84 {offsets = [1, 0, 0], sizes = [1, 8, 8], strides = [1, 1, 1]} : vector<4x8x8xf32> to vector<1x8x8xf32>
    %88 = vector.shape_cast %87 : vector<1x8x8xf32> to vector<8x8xf32>
    %89 = vector.extract_strided_slice %84 {offsets = [2, 0, 0], sizes = [1, 8, 8], strides = [1, 1, 1]} : vector<4x8x8xf32> to vector<1x8x8xf32>
    %90 = vector.shape_cast %89 : vector<1x8x8xf32> to vector<8x8xf32>
    %91 = vector.extract_strided_slice %84 {offsets = [3, 0, 0], sizes = [1, 8, 8], strides = [1, 1, 1]} : vector<4x8x8xf32> to vector<1x8x8xf32>
    %92 = vector.shape_cast %91 : vector<1x8x8xf32> to vector<8x8xf32>
    %93 = tpu.concatenate %86, %88, %90, %92 in 1 : vector<8x8xf32>, vector<8x8xf32>, vector<8x8xf32>, vector<8x8xf32> -> vector<8x32xf32>
    %94 = arith.truncf %93 : vector<8x32xf32> to vector<8x32xbf16>
    %c0_23 = arith.constant 0 : index
    %c0_24 = arith.constant 0 : index
    %95 = vector.load %arg4[%c0_23, %c0_24] : memref<32x32xbf16, #tpu.memory_space<vmem>>, vector<32x32xbf16>
    %cst_25 = arith.constant dense<0.000000e+00> : vector<8x32xf32>
    %96 = tpu.matmul %94, %95, %cst_25 {dimension_numbers = #tpu.dot_dimension_numbers<[1], [0], [0], [1], [0, 0, 1, 1], [], []>} : vector<8x32xbf16>, vector<32x32xbf16>, vector<8x32xf32> -> vector<8x32xf32>
    %97 = vector.broadcast %5 : vector<1x32xf32> to vector<8x32xf32>
    %98 = arith.addf %96, %97 : vector<8x32xf32>
    %99 = arith.addf %1, %98 : vector<8x32xf32>
    %cst_26 = arith.constant dense<0.000000e+00> : vector<8xf32>
    %100 = vector.multi_reduction <add>, %99, %cst_26 [1] : vector<8x32xf32> to vector<8xf32>
    %101 = vector.shape_cast %100 : vector<8xf32> to vector<8x1xf32>
    %cst_27 = arith.constant 3.200000e+01 : f32
    %102 = vector.broadcast %cst_27 : f32 to vector<8x1xf32>
    %103 = arith.divf %101, %102 : vector<8x1xf32>
    %104 = vector.broadcast %103 : vector<8x1xf32> to vector<8x32xf32>
    %105 = arith.subf %99, %104 : vector<8x32xf32>
    %106 = arith.mulf %105, %105 : vector<8x32xf32>
    %cst_28 = arith.constant dense<0.000000e+00> : vector<8xf32>
    %107 = vector.multi_reduction <add>, %106, %cst_28 [1] : vector<8x32xf32> to vector<8xf32>
    %108 = vector.shape_cast %107 : vector<8xf32> to vector<8x1xf32>
    %cst_29 = arith.constant 3.200000e+01 : f32
    %109 = vector.broadcast %cst_29 : f32 to vector<8x1xf32>
    %110 = arith.divf %108, %109 : vector<8x1xf32>
    %111 = vector.broadcast %103 : vector<8x1xf32> to vector<8x32xf32>
    %112 = arith.subf %99, %111 : vector<8x32xf32>
    %cst_30 = arith.constant 9.99999974E-6 : f32
    %113 = vector.broadcast %cst_30 : f32 to vector<8x1xf32>
    %114 = arith.addf %110, %113 : vector<8x1xf32>
    %115 = math.rsqrt %114 : vector<8x1xf32>
    %116 = vector.broadcast %115 : vector<8x1xf32> to vector<8x32xf32>
    %117 = arith.mulf %112, %116 : vector<8x32xf32>
    %118 = vector.broadcast %6 : vector<1x32xf32> to vector<8x32xf32>
    %119 = arith.mulf %117, %118 : vector<8x32xf32>
    %120 = vector.broadcast %7 : vector<1x32xf32> to vector<8x32xf32>
    %121 = arith.addf %119, %120 : vector<8x32xf32>
    %122 = arith.truncf %121 : vector<8x32xf32> to vector<8x32xbf16>
    %c0_31 = arith.constant 0 : index
    %c0_32 = arith.constant 0 : index
    %123 = vector.load %arg5[%c0_31, %c0_32] : memref<32x128xbf16, #tpu.memory_space<vmem>>, vector<32x128xbf16>
    %cst_33 = arith.constant dense<0.000000e+00> : vector<8x128xf32>
    %124 = tpu.matmul %122, %123, %cst_33 {dimension_numbers = #tpu.dot_dimension_numbers<[1], [0], [0], [1], [0, 0, 1, 1], [], []>} : vector<8x32xbf16>, vector<32x128xbf16>, vector<8x128xf32> -> vector<8x128xf32>
    %125 = vector.broadcast %8 : vector<1x128xf32> to vector<8x128xf32>
    %126 = arith.addf %124, %125 : vector<8x128xf32>
    %cst_34 = arith.constant 0.000000e+00 : f32
    %127 = vector.broadcast %cst_34 : f32 to vector<8x128xf32>
    %128 = arith.maximumf %126, %127 : vector<8x128xf32>
    %129 = arith.truncf %128 : vector<8x128xf32> to vector<8x128xbf16>
    %c0_35 = arith.constant 0 : index
    %c0_36 = arith.constant 0 : index
    %130 = vector.load %arg6[%c0_35, %c0_36] : memref<128x32xbf16, #tpu.memory_space<vmem>>, vector<128x32xbf16>
    %cst_37 = arith.constant dense<0.000000e+00> : vector<8x32xf32>
    %131 = tpu.matmul %129, %130, %cst_37 {dimension_numbers = #tpu.dot_dimension_numbers<[1], [0], [0], [1], [0, 0, 1, 1], [], []>} : vector<8x128xbf16>, vector<128x32xbf16>, vector<8x32xf32> -> vector<8x32xf32>
    %132 = vector.broadcast %9 : vector<1x32xf32> to vector<8x32xf32>
    %133 = arith.addf %131, %132 : vector<8x32xf32>
    %134 = arith.addf %99, %133 : vector<8x32xf32>
    %c0_38 = arith.constant 0 : index
    %c0_39 = arith.constant 0 : index
    %c0_40 = arith.constant 0 : index
    %135 = vector.load %arg7[%c0_38, %c0_39, %c0_40] : memref<1x8x32xf32, #tpu.memory_space<vmem>>, vector<1x8x32xf32>
    %136 = vector.shape_cast %135 : vector<1x8x32xf32> to vector<8x32xf32>
    %137 = vector.shape_cast %134 : vector<8x32xf32> to vector<1x8x32xf32>
    tpu.vector_store %arg7[%c0_38, %c0_39, %c0_40], %137 {strides = array<i32>} : memref<1x8x32xf32, #tpu.memory_space<vmem>>, vector<1x8x32xf32>,
    return
  }
  func.func @transform_0(%arg0: i32) -> (i32, i32, i32) {
    %c0_i32 = arith.constant 0 : i32
    %c0_i32_0 = arith.constant 0 : i32
    %c0_i32_1 = arith.constant 0 : i32
    return %arg0, %c0_i32, %c0_i32_0 : i32, i32, i32
  }
  func.func @transform_1(%arg0: i32) -> (i32, i32) {
    %c0_i32 = arith.constant 0 : i32
    %c0_i32_0 = arith.constant 0 : i32
    %c0_i32_1 = arith.constant 0 : i32
    return %c0_i32, %c0_i32_0 : i32, i32
  }
  func.func @transform_2(%arg0: i32) -> (i32, i32) {
    %c0_i32 = arith.constant 0 : i32
    %c0_i32_0 = arith.constant 0 : i32
    %c0_i32_1 = arith.constant 0 : i32
    return %c0_i32, %c0_i32_0 : i32, i32
  }
  func.func @transform_3(%arg0: i32) -> (i32, i32) {
    %c0_i32 = arith.constant 0 : i32
    %c0_i32_0 = arith.constant 0 : i32
    %c0_i32_1 = arith.constant 0 : i32
    return %c0_i32, %c0_i32_0 : i32, i32
  }
  func.func @transform_4(%arg0: i32) -> (i32, i32) {
    %c0_i32 = arith.constant 0 : i32
    %c0_i32_0 = arith.constant 0 : i32
    %c0_i32_1 = arith.constant 0 : i32
    return %c0_i32, %c0_i32_0 : i32, i32
  }
  func.func @transform_5(%arg0: i32) -> (i32, i32) {
    %c0_i32 = arith.constant 0 : i32
    %c0_i32_0 = arith.constant 0 : i32
    %c0_i32_1 = arith.constant 0 : i32
    return %c0_i32, %c0_i32_0 : i32, i32
  }
  func.func @transform_6(%arg0: i32) -> (i32, i32, i32) {
    %c0_i32 = arith.constant 0 : i32
    %c0_i32_0 = arith.constant 0 : i32
    %c0_i32_1 = arith.constant 0 : i32
    return %arg0, %c0_i32, %c0_i32_0 : i32, i32, i32
  }
}

</mosaic_0001>

<llo_original>
// kernel: transformer_block.1
$region0: #{transformer_block.1}
  #allocation0 [shape = 'u32[]', space=smem, size = 0x4, offset = 0x4, fixed_abs, tag = 'smem constant byte address 0x4 - core index']
  #allocation1 [shape = 'u32[144,128]{1,0:T(1,128)}', space=vmem, size = 0x12000, scoped, tag = 'internal scratch']
  %s0 = inlined_call_operand.vmem [shape: f32[2,8,32], index: 0, kind: input, shape index: {}]
  %s1 = inlined_call_operand.vmem [shape: f32[8,128], index: 1, kind: input, shape index: {}]
  %s2 = inlined_call_operand.vmem [shape: bf16[32,96], index: 2, kind: input, shape index: {}]
  %s3 = inlined_call_operand.vmem [shape: bf16[32,32], index: 3, kind: input, shape index: {}]
  %s4 = inlined_call_operand.vmem [shape: bf16[32,128], index: 4, kind: input, shape index: {}]
  %s5 = inlined_call_operand.vmem [shape: bf16[128,32], index: 5, kind: input, shape index: {}]
  %s6 = inlined_call_operand.vmem [shape: f32[2,8,32], index: 6, kind: output, shape index: {}]
  %s7 = sld [smem:[#allocation0]]
  $region57: #{transformer_block.1} parent=0
    _
  %s9 = ssub.s32 1, %s7
  %s10 = scalar_select 0, %s9, %s7
  loop: start=0, step=1, limit=4
  $region2: #{transformer_block.1} parent=0 // loop_pre_header
    _
  $region3: #{transformer_block.1} parent=0 // loop_header
    %s12 = sphi 0, %s16
    %p13 = scmp.ge.s32.totalorder %s12, 4
    %s22 = sphi 0, %s24
    %s25 = sphi 0, %s22
    %s26 = sphi 0, %s25
    %s42 = sphi 0, %s26
    %s46 = sphi 0, %s46
    %s48 = sphi 0, %s46
    %s49 = sphi 0, %s48
    %s63 = sphi 0, %s49
    %s67 = sphi 0, %s67
    %s69 = sphi 0, %s67
    %s70 = sphi 0, %s69
    %s84 = sphi 0, %s70
    %s88 = sphi 0, %s88
    %s90 = sphi 0, %s88
    %s91 = sphi 0, %s90
    %s105 = sphi 0, %s91
    %s109 = sphi 0, %s109
    %s111 = sphi 0, %s109
    %s112 = sphi 0, %s111
    %s126 = sphi 0, %s112
    %s130 = sphi 0, %s130
    %s132 = sphi 0, %s130
    %s133 = sphi 0, %s132
    %s147 = sphi 0, %s133
    %s153 = sphi 0, %s155
    %s156 = sphi 0, %s153
    %s157 = sphi 0, %s156
    %s173 = sphi 0, %s157
  $region4: #{transformer_block.1} parent=0 // loop_header_branch
    %15 = sbr.rel (%p13) target = $region8
  $region5: #{transformer_block.1} parent=0 // loop_body
    %s17 = ssub.s32 %s12, 1
    %s18 = ssub.s32 %s12, 2
    %s19 = sadd.s32 %s12, 1
    %s20 = ssub.s32 %s12, %s19
    %p21 = scmp.eq.s32.totalorder %s20, 0
    %s23 = sadd.s32 %s22, 1
    %s24 = scalar_select %p21, %s22, %s23
    %p27 = pneg %p21
    %p28 = scmp.eq.s32.totalorder %s12, 1
    %p29 = por %p27, %p28
    %p30 = scmp.ne.s32.totalorder %s22, %s25
    %p31 = scmp.eq.s32.totalorder %s12, 0
    %p32 = por %p30, %p31
    %p33 = scmp.ne.s32.totalorder %s22, %s25
    %p34 = scmp.eq.s32.totalorder %s17, 1
    %p35 = por %p33, %p34
    %p36 = scmp.ne.s32.totalorder %s25, %s26
    %p37 = scmp.eq.s32.totalorder %s17, 0
    %p38 = por %p36, %p37
    %p39 = scmp.ne.s32.totalorder %s25, %s26
    %p40 = scmp.eq.s32.totalorder %s18, 1
    %p41 = por %p39, %p40
    %p43 = scmp.ne.s32.totalorder %s26, %s42
    %p44 = scmp.eq.s32.totalorder %s18, 0
    %p45 = por %p43, %p44
    %s47 = sadd.s32 %s46, 1
    %p50 = scmp.eq.s32.totalorder %s12, 1
    %p51 = scmp.ne.s32.totalorder %s46, %s48
    %p52 = scmp.eq.s32.totalorder %s12, 0
    %p53 = por %p51, %p52
    %p54 = scmp.ne.s32.totalorder %s46, %s48
    %p55 = scmp.eq.s32.totalorder %s17, 1
    %p56 = por %p54, %p55
    %p57 = scmp.ne.s32.totalorder %s48, %s49
    %p58 = scmp.eq.s32.totalorder %s17, 0
    %p59 = por %p57, %p58
    %p60 = scmp.ne.s32.totalorder %s48, %s49
    %p61 = scmp.eq.s32.totalorder %s18, 1
    %p62 = por %p60, %p61
    %p64 = scmp.ne.s32.totalorder %s49, %s63
    %p65 = scmp.eq.s32.totalorder %s18, 0
    %p66 = por %p64, %p65
    %s68 = sadd.s32 %s67, 1
    %p71 = scmp.eq.s32.totalorder %s12, 1
    %p72 = scmp.ne.s32.totalorder %s67, %s69
    %p73 = scmp.eq.s32.totalorder %s12, 0
    %p74 = por %p72, %p73
    %p75 = scmp.ne.s32.totalorder %s67, %s69
    %p76 = scmp.eq.s32.totalorder %s17, 1
    %p77 = por %p75, %p76
    %p78 = scmp.ne.s32.totalorder %s69, %s70
    %p79 = scmp.eq.s32.totalorder %s17, 0
    %p80 = por %p78, %p79
    %p81 = scmp.ne.s32.totalorder %s69, %s70
    %p82 = scmp.eq.s32.totalorder %s18, 1
    %p83 = por %p81, %p82
    %p85 = scmp.ne.s32.totalorder %s70, %s84
    %p86 = scmp.eq.s32.totalorder %s18, 0
    %p87 = por %p85, %p86
    %s89 = sadd.s32 %s88, 1
    %p92 = scmp.eq.s32.totalorder %s12, 1
    %p93 = scmp.ne.s32.totalorder %s88, %s90
    %p94 = scmp.eq.s32.totalorder %s12, 0
    %p95 = por %p93, %p94
    %p96 = scmp.ne.s32.totalorder %s88, %s90
    %p97 = scmp.eq.s32.totalorder %s17, 1
    %p98 = por %p96, %p97
    %p99 = scmp.ne.s32.totalorder %s90, %s91
    %p100 = scmp.eq.s32.totalorder %s17, 0
    %p101 = por %p99, %p100
    %p102 = scmp.ne.s32.totalorder %s90, %s91
    %p103 = scmp.eq.s32.totalorder %s18, 1
    %p104 = por %p102, %p103
    %p106 = scmp.ne.s32.totalorder %s91, %s105
    %p107 = scmp.eq.s32.totalorder %s18, 0
    %p108 = por %p106, %p107
    %s110 = sadd.s32 %s109, 1
    %p113 = scmp.eq.s32.totalorder %s12, 1
    %p114 = scmp.ne.s32.totalorder %s109, %s111
    %p115 = scmp.eq.s32.totalorder %s12, 0
    %p116 = por %p114, %p115
    %p117 = scmp.ne.s32.totalorder %s109, %s111
    %p118 = scmp.eq.s32.totalorder %s17, 1
    %p119 = por %p117, %p118
    %p120 = scmp.ne.s32.totalorder %s111, %s112
    %p121 = scmp.eq.s32.totalorder %s17, 0
    %p122 = por %p120, %p121
    %p123 = scmp.ne.s32.totalorder %s111, %s112
    %p124 = scmp.eq.s32.totalorder %s18, 1
    %p125 = por %p123, %p124
    %p127 = scmp.ne.s32.totalorder %s112, %s126
    %p128 = scmp.eq.s32.totalorder %s18, 0
    %p129 = por %p127, %p128
    %s131 = sadd.s32 %s130, 1
    %p134 = scmp.eq.s32.totalorder %s12, 1
    %p135 = scmp.ne.s32.totalorder %s130, %s132
    %p136 = scmp.eq.s32.totalorder %s12, 0
    %p137 = por %p135, %p136
    %p138 = scmp.ne.s32.totalorder %s130, %s132
    %p139 = scmp.eq.s32.totalorder %s17, 1
    %p140 = por %p138, %p139
    %p141 = scmp.ne.s32.totalorder %s132, %s133
    %p142 = scmp.eq.s32.totalorder %s17, 0
    %p143 = por %p141, %p142
    %p144 = scmp.ne.s32.totalorder %s132, %s133
    %p145 = scmp.eq.s32.totalorder %s18, 1
    %p146 = por %p144, %p145
    %p148 = scmp.ne.s32.totalorder %s133, %s147
    %p149 = scmp.eq.s32.totalorder %s18, 0
    %p150 = por %p148, %p149
    %s151 = ssub.s32 %s12, %s19
    %p152 = scmp.eq.s32.totalorder %s151, 0
    %s154 = sadd.s32 %s153, 1
    %s155 = scalar_select %p152, %s153, %s154
    %p158 = pneg %p152
    %p159 = scmp.eq.s32.totalorder %s12, 1
    %p160 = por %p158, %p159
    %p161 = scmp.ne.s32.totalorder %s153, %s156
    %p162 = scmp.eq.s32.totalorder %s12, 0
    %p163 = por %p161, %p162
    %p164 = scmp.ne.s32.totalorder %s153, %s156
    %p165 = scmp.eq.s32.totalorder %s17, 1
    %p166 = por %p164, %p165
    %p167 = scmp.ne.s32.totalorder %s156, %s157
    %p168 = scmp.eq.s32.totalorder %s17, 0
    %p169 = por %p167, %p168
    %p170 = scmp.ne.s32.totalorder %s156, %s157
    %p171 = scmp.eq.s32.totalorder %s18, 1
    %p172 = por %p170, %p171
    %p174 = scmp.ne.s32.totalorder %s157, %s173
    %p175 = scmp.eq.s32.totalorder %s18, 0
    %p176 = por %p174, %p175
    %p177 = scmp.le.s32.totalorder 1, %s12
    %p178 = scmp.lt.s32.totalorder %s12, 3
    %p179 = pnand %p177, %p178
    %p180 = pneg %p179
    // Predicated region
    $region9: #{transformer_block.1} parent=5 // pred_check
      _
    $region10: #{transformer_block.1} parent=5 // pred_check_branch
      %182 = sbr.rel (%p179) target = $region12
    $region11: #{transformer_block.1} parent=5 // pred_region
      %s183 = ssub.s32 %s12, 1
      // Predicated region
      $region13: #{transformer_block.1} parent=11 // pred_check
        %p184 = pneg %p59
      $region14: #{transformer_block.1} parent=11 // pred_check_branch
        %186 = sbr.rel (%p184) target = $region16
      $region15: #{transformer_block.1} parent=11 // pred_region
        _
      $region16: #{transformer_block.1} parent=11 // pred_fallthru
        _
      // Predicated region
      $region17: #{transformer_block.1} parent=11 // pred_check
        %p187 = pneg %p80
      $region18: #{transformer_block.1} parent=11 // pred_check_branch
        %189 = sbr.rel (%p187) target = $region20
      $region19: #{transformer_block.1} parent=11 // pred_region
        _
      $region20: #{transformer_block.1} parent=11 // pred_fallthru
        _
      // Predicated region
      $region21: #{transformer_block.1} parent=11 // pred_check
        %p190 = pneg %p101
      $region22: #{transformer_block.1} parent=11 // pred_check_branch
        %192 = sbr.rel (%p190) target = $region24
      $region23: #{transformer_block.1} parent=11 // pred_region
        _
      $region24: #{transformer_block.1} parent=11 // pred_fallthru
        _
      // Predicated region
      $region25: #{transformer_block.1} parent=11 // pred_check
        %p193 = pneg %p122
      $region26: #{transformer_block.1} parent=11 // pred_check_branch
        %195 = sbr.rel (%p193) target = $region28
      $region27: #{transformer_block.1} parent=11 // pred_region
        _
      $region28: #{transformer_block.1} parent=11 // pred_fallthru
        _
      // Predicated region
      $region29: #{transformer_block.1} parent=11 // pred_check
        %p196 = pneg %p143
      $region30: #{transformer_block.1} parent=11 // pred_check_branch
        %198 = sbr.rel (%p196) target = $region32
      $region31: #{transformer_block.1} parent=11 // pred_region
        _
      $region32: #{transformer_block.1} parent=11 // pred_fallthru
        _
    $region12: #{transformer_block.1} parent=5 // pred_fallthru
      _
    %p199 = scmp.lt.s32.totalorder %s12, 2
    // Predicated region
    $region33: #{transformer_block.1} parent=5 // pred_check
      %p200 = pneg %p199
    $region34: #{transformer_block.1} parent=5 // pred_check_branch
      %202 = sbr.rel (%p200) target = $region36
    $region35: #{transformer_block.1} parent=5 // pred_region
      // Predicated region
      $region37: #{transformer_block.1} parent=35 // pred_check
        %p203 = pneg %p32
      $region38: #{transformer_block.1} parent=35 // pred_check_branch
        %205 = sbr.rel (%p203) target = $region40
      $region39: #{transformer_block.1} parent=35 // pred_region
        %p206 = scmp.lt.s32.totalorder %s12, 1
        %s207 = scalar_select %p206, %s12, 1
        %s208 = smul.addr %s207, 8
        %s209 = scalar_lea.vmem %s0, %s208
      $region40: #{transformer_block.1} parent=35 // pred_fallthru
        _
    $region36: #{transformer_block.1} parent=5 // pred_fallthru
      _
    %p210 = scmp.le.s32.totalorder 1, %s12
    %p211 = scmp.lt.s32.totalorder %s12, 3
    %p212 = pnand %p210, %p211
    %p213 = pneg %p212
    // Predicated region
    $region41: #{transformer_block.1} parent=5 // pred_check
      _
    $region42: #{transformer_block.1} parent=5 // pred_check_branch
      %215 = sbr.rel (%p212) target = $region44
    $region43: #{transformer_block.1} parent=5 // pred_region
      %s216 = ssub.s32 %s12, 1
      %p217 = scmp.lt.s32.totalorder %s17, 1
      %s218 = scalar_select %p217, %s17, 1
      %s219 = smul.addr %s218, 8
      %s220 = scalar_lea.vmem %s0, %s219
      %p221 = pneg %p38
      %p222 = pneg %p35
      %p223 = pneg %p59
      %p224 = pneg %p56
      %p225 = pneg %p80
      %p226 = pneg %p77
      %p227 = pneg %p101
      %p228 = pneg %p98
      %p229 = pneg %p122
      %p230 = pneg %p119
      %p231 = pneg %p143
      %p232 = pneg %p140
      %p233 = pneg %p169
      %p234 = pneg %p166
      %p235 = scmp.lt.s32.totalorder %s17, 1
      %s236 = scalar_select %p235, %s17, 1
      %s237 = smul.addr %s236, 8
      %s238 = scalar_lea.vmem %s6, %s237
      %p239 = scmp.lt.s32.totalorder %s17, 1
      %s240 = scalar_select %p239, %s17, 1
      %s241 = smul.addr %s240, 8
      %s242 = scalar_lea.vmem %s0, %s241
      %p243 = scmp.lt.s32.totalorder %s17, 1
      %s244 = scalar_select %p243, %s17, 1
      %s245 = smul.addr %s244, 8
      %s246 = scalar_lea.vmem %s6, %s245
      %v248 = vld [vmem:[%s242] sm:$0xff]
      %v249 = vld [vmem:[%s1] sm:$0x1]
      %v250 = vld [vmem:[%s1 + $0x1] sm:$0x1]
      %v251 = vld [vmem:[%s1 + $0x2] sm:$0x1]
      %v252 = vld [vmem:[%s1 + $0x3] sm:$0x1]
      %v253 = vld [vmem:[%s1 + $0x4] sm:$0x1]
      %v254 = vld [vmem:[%s1 + $0x5] sm:$0x1]
      %v255 = vld [vmem:[%s1 + $0x6] sm:$0x1]
      %v256 = vld [vmem:[%s1 + $0x7] sm:$0x1]
      %vm257 = vcmask 261120
      %v258 = vsel %vm257, %v248, 0.0
      %259 = vadd.xlane.f32.xlu0 %v258
      %v260 = vpop.xlane.xlu0 %259
      %v261 = vrcp.pop 32.0
      %v262 = vmul.f32 %v260, %v261
      %v263 = vsub.f32 %v248, %v262
      %v264 = vmul.f32 %v263, %v263
      %v265 = vsel %vm257, %v264, 0.0
      %266 = vadd.xlane.f32.xlu0 %v265
      %v267 = vpop.xlane.xlu0 %266
      %v268 = vmul.f32 %v267, %v261
      %v269 = vadd.f32 %v268, 1e-05
      %v270 = vrsqrt.pop %v269
      %v271 = vmul.f32 %v263, %v270
      %v272 = vlaneseq
      %v273 = vshrl.u32 %v272, 7
      %v274 = vsub.s32 0, %v273
      %v275 = vrot.slane %v249, %v274
      %v276 = vmul.f32 %v271, %v275
      %v277 = vlaneseq
      %v278 = vshrl.u32 %v277, 7
      %v279 = vsub.s32 0, %v278
      %v280 = vrot.slane %v250, %v279
      %v281 = vadd.f32 %v276, %v280
      %v282 = vpack.c.bf16 %v281, %v281
      %v283 = vld [vmem:[%s2] sm:$0xf]
      %v284 = vld [vmem:[%s2 + $0x4] sm:$0xf]
      %v285 = vld [vmem:[%s2 + $0x8] sm:$0xf]
      %v286 = vld [vmem:[%s2 + $0xc] sm:$0xf]
      %v287 = vlaneseq
      %v288 = vshrl.u32 %v287, 7
      %v289 = vsub.s32 0, %v288
      %v290 = vrot.slane %v251, %v289
      %v295 = vunpack.c.l.b16 %v283
      %v296 = vunpack.c.l.b16 %v284
      %v297 = vunpack.c.l.b16 %v285
      %v298 = vunpack.c.l.b16 %v286
      %v299 = vpack.c.b16 %v296, %v295
      %v300 = vpack.c.b16 %v298, %v297
      %v304 = vsel %vm257, %v282, 0
      %306 = vmatprep.subr.bf16.mxu0 0
      %307 = vmatpush1.bf16.msra.mxu0 0
      %308 = vmatprep.subr.bf16.mxu0 0
      %309 = vmatpush1.bf16.msra.mxu0 0
      %310 = vmatprep.subr.bf16.mxu0 0
      %311 = vmatpush1.bf16.msra.mxu0 0
      %312 = vmatprep.subr.bf16.mxu0 0
      %313 = vmatpush1.bf16.msra.mxu0 0
      %314 = vmatprep.subr.bf16.mxu0 0
      %315 = vmatpush1.bf16.msra.mxu0 0
      %316 = vmatprep.subr.bf16.mxu0 0
      %317 = vmatpush1.bf16.msra.mxu0 0
      %318 = vmatprep.subr.bf16.mxu0 0
      %319 = vmatpush1.bf16.msra.mxu0 %v300
      %320 = vmatprep.subr.bf16.mxu0 0
      %321 = vmatpush1.bf16.msra.mxu0 %v299
      %322 = vmatprep.subr.bf16.mxu0 0
      %323 = vmatpush2.bf16.msra.mxu0 0
      %324 = vmatprep.subr.bf16.mxu0 0
      %325 = vmatpush2.bf16.msra.mxu0 0
      %326 = vmatprep.subr.bf16.mxu0 0
      %327 = vmatpush2.bf16.msra.mxu0 0
      %328 = vmatprep.subr.bf16.mxu0 0
      %329 = vmatpush2.bf16.msra.mxu0 0
      %330 = vmatprep.subr.bf16.mxu0 0
      %331 = vmatpush2.bf16.msra.mxu0 0
      %332 = vmatprep.subr.bf16.mxu0 0
      %333 = vmatpush2.bf16.msra.mxu0 0
      %334 = vmatprep.subr.bf16.mxu0 0
      %335 = vmatpush2.bf16.msra.mxu0 0
      %336 = vmatprep.subr.bf16.mxu0 0
      %337 = vmatpush2.bf16.msra.mxu0 0
      %338 = vmatprep.mubr.bf16.mxu0 0
      %339 = vmatmul.mubr.bf16.gmra.mxu0 %v304
      %v340 = vpop.f32.mrf.mxu0
      %v341 = vadd.f32 %v290, %v340
      %v342 = vpop.f32.mrf.mxu0
      %v343 = vpop.f32.mrf.mxu0
      %v344 = vpop.f32.mrf.mxu0
      %345 = vdwg.mxu0
      %v346 = vmul.f32 %v341, 0.35355338
      %348 = vrot.lane.b32.xlu0 %v346, 120
      %v349 = vpop.permute.xlu0 %348
      %351 = vrot.lane.b32.xlu0 %v346, 112
      %v352 = vpop.permute.xlu0 %351
      %354 = vrot.lane.b32.xlu0 %v346, 104
      %v355 = vpop.permute.xlu0 %354
      %v357 = vpack.c.bf16 %v346, %v346
      %v358 = vpack.c.bf16 %v349, %v349
      %v359 = vpack.c.bf16 %v352, %v352
      %v360 = vpack.c.bf16 %v355, %v355
      %362 = vrot.lane.b32.xlu0 %v341, 120
      %v363 = vpop.permute.xlu0 %362
      %365 = vrot.lane.b32.xlu0 %v341, 112
      %v366 = vpop.permute.xlu0 %365
      %368 = vrot.lane.b32.xlu0 %v341, 104
      %v369 = vpop.permute.xlu0 %368
      %v371 = vpack.c.bf16 %v341, %v341
      %v372 = vpack.c.bf16 %v363, %v363
      %v373 = vpack.c.bf16 %v366, %v366
      %v374 = vpack.c.bf16 %v369, %v369
      %376 = vrot.lane.b32.xlu0 %v371, 96
      %v377 = vpop.permute.xlu0 %376
      %vm378 = vcmask 64512
      %v380 = vsel %vm378, %v357, 0
      %v383 = vsel %vm378, %v377, 0
      %385 = vmatprep.subr.bf16.mxu0 0
      %386 = vmatpush1.bf16.xpose.msra.mxu0 0
      %387 = vmatprep.subr.bf16.mxu0 0
      %388 = vmatpush1.bf16.xpose.msra.mxu0 0
      %389 = vmatprep.subr.bf16.mxu0 0
      %390 = vmatpush1.bf16.xpose.msra.mxu0 0
      %391 = vmatprep.subr.bf16.mxu0 0
      %392 = vmatpush1.bf16.xpose.msra.mxu0 0
      %393 = vmatprep.subr.bf16.mxu0 0
      %394 = vmatpush1.bf16.xpose.msra.mxu0 0
      %395 = vmatprep.subr.bf16.mxu0 0
      %396 = vmatpush1.bf16.xpose.msra.mxu0 0
      %397 = vmatprep.subr.bf16.mxu0 0
      %398 = vmatpush1.bf16.xpose.msra.mxu0 0
      %399 = vmatprep.subr.bf16.mxu0 0
      %400 = vmatpush1.bf16.xpose.msra.mxu0 %v383
      %401 = vmatprep.subr.bf16.mxu0 0
      %402 = vmatpush2.bf16.xpose.msra.mxu0 0
      %403 = vmatprep.subr.bf16.mxu0 0
      %404 = vmatpush2.bf16.xpose.msra.mxu0 0
      %405 = vmatprep.subr.bf16.mxu0 0
      %406 = vmatpush2.bf16.xpose.msra.mxu0 0
      %407 = vmatprep.subr.bf16.mxu0 0
      %408 = vmatpush2.bf16.xpose.msra.mxu0 0
      %409 = vmatprep.subr.bf16.mxu0 0
      %410 = vmatpush2.bf16.xpose.msra.mxu0 0
      %411 = vmatprep.subr.bf16.mxu0 0
      %412 = vmatpush2.bf16.xpose.msra.mxu0 0
      %413 = vmatprep.subr.bf16.mxu0 0
      %414 = vmatpush2.bf16.xpose.msra.mxu0 0
      %415 = vmatprep.subr.bf16.mxu0 0
      %416 = vmatpush2.bf16.xpose.msra.mxu0 0
      %417 = vmatprep.mubr.bf16.mxu0 0
      %418 = vmatmul.mubr.bf16.gmra.mxu0 %v380
      %v419 = vpop.f32.mrf.mxu0
      %v420 = vadd.f32 0.0, %v419
      %v421 = vpop.f32.mrf.mxu0
      %v422 = vpop.f32.mrf.mxu0
      %v423 = vpop.f32.mrf.mxu0
      %424 = vdwg.mxu0
      %426 = vrot.lane.b32.xlu0 %v372, 96
      %v427 = vpop.permute.xlu0 %426
      %v429 = vsel %vm378, %v358, 0
      %v432 = vsel %vm378, %v427, 0
      %434 = vmatprep.subr.bf16.mxu0 0
      %435 = vmatpush1.bf16.xpose.msra.mxu0 0
      %436 = vmatprep.subr.bf16.mxu0 0
      %437 = vmatpush1.bf16.xpose.msra.mxu0 0
      %438 = vmatprep.subr.bf16.mxu0 0
      %439 = vmatpush1.bf16.xpose.msra.mxu0 0
      %440 = vmatprep.subr.bf16.mxu0 0
      %441 = vmatpush1.bf16.xpose.msra.mxu0 0
      %442 = vmatprep.subr.bf16.mxu0 0
      %443 = vmatpush1.bf16.xpose.msra.mxu0 0
      %444 = vmatprep.subr.bf16.mxu0 0
      %445 = vmatpush1.bf16.xpose.msra.mxu0 0
      %446 = vmatprep.subr.bf16.mxu0 0
      %447 = vmatpush1.bf16.xpose.msra.mxu0 0
      %448 = vmatprep.subr.bf16.mxu0 0
      %449 = vmatpush1.bf16.xpose.msra.mxu0 %v432
      %450 = vmatprep.subr.bf16.mxu0 0
      %451 = vmatpush2.bf16.xpose.msra.mxu0 0
      %452 = vmatprep.subr.bf16.mxu0 0
      %453 = vmatpush2.bf16.xpose.msra.mxu0 0
      %454 = vmatprep.subr.bf16.mxu0 0
      %455 = vmatpush2.bf16.xpose.msra.mxu0 0
      %456 = vmatprep.subr.bf16.mxu0 0
      %457 = vmatpush2.bf16.xpose.msra.mxu0 0
      %458 = vmatprep.subr.bf16.mxu0 0
      %459 = vmatpush2.bf16.xpose.msra.mxu0 0
      %460 = vmatprep.subr.bf16.mxu0 0
      %461 = vmatpush2.bf16.xpose.msra.mxu0 0
      %462 = vmatprep.subr.bf16.mxu0 0
      %463 = vmatpush2.bf16.xpose.msra.mxu0 0
      %464 = vmatprep.subr.bf16.mxu0 0
      %465 = vmatpush2.bf16.xpose.msra.mxu0 0
      %466 = vmatprep.mubr.bf16.mxu0 0
      %467 = vmatmul.mubr.bf16.gmra.mxu0 %v429
      %v468 = vpop.f32.mrf.mxu0
      %v469 = vadd.f32 0.0, %v468
      %v470 = vpop.f32.mrf.mxu0
      %v471 = vpop.f32.mrf.mxu0
      %v472 = vpop.f32.mrf.mxu0
      %473 = vdwg.mxu0
      %475 = vrot.lane.b32.xlu0 %v373, 96
      %v476 = vpop.permute.xlu0 %475
      %v478 = vsel %vm378, %v359, 0
      %v481 = vsel %vm378, %v476, 0
      %483 = vmatprep.subr.bf16.mxu0 0
      %484 = vmatpush1.bf16.xpose.msra.mxu0 0
      %485 = vmatprep.subr.bf16.mxu0 0
      %486 = vmatpush1.bf16.xpose.msra.mxu0 0
      %487 = vmatprep.subr.bf16.mxu0 0
      %488 = vmatpush1.bf16.xpose.msra.mxu0 0
      %489 = vmatprep.subr.bf16.mxu0 0
      %490 = vmatpush1.bf16.xpose.msra.mxu0 0
      %491 = vmatprep.subr.bf16.mxu0 0
      %492 = vmatpush1.bf16.xpose.msra.mxu0 0
      %493 = vmatprep.subr.bf16.mxu0 0
      %494 = vmatpush1.bf16.xpose.msra.mxu0 0
      %495 = vmatprep.subr.bf16.mxu0 0
      %496 = vmatpush1.bf16.xpose.msra.mxu0 0
      %497 = vmatprep.subr.bf16.mxu0 0
      %498 = vmatpush1.bf16.xpose.msra.mxu0 %v481
      %499 = vmatprep.subr.bf16.mxu0 0
      %500 = vmatpush2.bf16.xpose.msra.mxu0 0
      %501 = vmatprep.subr.bf16.mxu0 0
      %502 = vmatpush2.bf16.xpose.msra.mxu0 0
      %503 = vmatprep.subr.bf16.mxu0 0
      %504 = vmatpush2.bf16.xpose.msra.mxu0 0
      %505 = vmatprep.subr.bf16.mxu0 0
      %506 = vmatpush2.bf16.xpose.msra.mxu0 0
      %507 = vmatprep.subr.bf16.mxu0 0
      %508 = vmatpush2.bf16.xpose.msra.mxu0 0
      %509 = vmatprep.subr.bf16.mxu0 0
      %510 = vmatpush2.bf16.xpose.msra.mxu0 0
      %511 = vmatprep.subr.bf16.mxu0 0
      %512 = vmatpush2.bf16.xpose.msra.mxu0 0
      %513 = vmatprep.subr.bf16.mxu0 0
      %514 = vmatpush2.bf16.xpose.msra.mxu0 0
      %515 = vmatprep.mubr.bf16.mxu0 0
      %516 = vmatmul.mubr.bf16.gmra.mxu0 %v478
      %v517 = vpop.f32.mrf.mxu0
      %v518 = vadd.f32 0.0, %v517
      %v519 = vpop.f32.mrf.mxu0
      %v520 = vpop.f32.mrf.mxu0
      %v521 = vpop.f32.mrf.mxu0
      %522 = vdwg.mxu0
      %524 = vrot.lane.b32.xlu0 %v374, 96
      %v525 = vpop.permute.xlu0 %524
      %v527 = vsel %vm378, %v360, 0
      %v530 = vsel %vm378, %v525, 0
      %532 = vmatprep.subr.bf16.mxu0 0
      %533 = vmatpush1.bf16.xpose.msra.mxu0 0
      %534 = vmatprep.subr.bf16.mxu0 0
      %535 = vmatpush1.bf16.xpose.msra.mxu0 0
      %536 = vmatprep.subr.bf16.mxu0 0
      %537 = vmatpush1.bf16.xpose.msra.mxu0 0
      %538 = vmatprep.subr.bf16.mxu0 0
      %539 = vmatpush1.bf16.xpose.msra.mxu0 0
      %540 = vmatprep.subr.bf16.mxu0 0
      %541 = vmatpush1.bf16.xpose.msra.mxu0 0
      %542 = vmatprep.subr.bf16.mxu0 0
      %543 = vmatpush1.bf16.xpose.msra.mxu0 0
      %544 = vmatprep.subr.bf16.mxu0 0
      %545 = vmatpush1.bf16.xpose.msra.mxu0 0
      %546 = vmatprep.subr.bf16.mxu0 0
      %547 = vmatpush1.bf16.xpose.msra.mxu0 %v530
      %548 = vmatprep.subr.bf16.mxu0 0
      %549 = vmatpush2.bf16.xpose.msra.mxu0 0
      %550 = vmatprep.subr.bf16.mxu0 0
      %551 = vmatpush2.bf16.xpose.msra.mxu0 0
      %552 = vmatprep.subr.bf16.mxu0 0
      %553 = vmatpush2.bf16.xpose.msra.mxu0 0
      %554 = vmatprep.subr.bf16.mxu0 0
      %555 = vmatpush2.bf16.xpose.msra.mxu0 0
      %556 = vmatprep.subr.bf16.mxu0 0
      %557 = vmatpush2.bf16.xpose.msra.mxu0 0
      %558 = vmatprep.subr.bf16.mxu0 0
      %559 = vmatpush2.bf16.xpose.msra.mxu0 0
      %560 = vmatprep.subr.bf16.mxu0 0
      %561 = vmatpush2.bf16.xpose.msra.mxu0 0
      %562 = vmatprep.subr.bf16.mxu0 0
      %563 = vmatpush2.bf16.xpose.msra.mxu0 0
      %564 = vmatprep.mubr.bf16.mxu0 0
      %565 = vmatmul.mubr.bf16.gmra.mxu0 %v527
      %v566 = vpop.f32.mrf.mxu0
      %v567 = vadd.f32 0.0, %v566
      %v568 = vpop.f32.mrf.mxu0
      %v569 = vpop.f32.mrf.mxu0
      %v570 = vpop.f32.mrf.mxu0
      %571 = vdwg.mxu0
      %v572 = vsel %vm378, %v420, -inf
      %573 = vmax.xlane.f32.xlu0 %v572
      %v574 = vpop.xlane.xlu0 %573
      %v575 = vsel %vm378, %v469, -inf
      %576 = vmax.xlane.f32.xlu0 %v575
      %v577 = vpop.xlane.xlu0 %576
      %v578 = vsel %vm378, %v518, -inf
      %579 = vmax.xlane.f32.xlu0 %v578
      %v580 = vpop.xlane.xlu0 %579
      %v581 = vsel %vm378, %v567, -inf
      %582 = vmax.xlane.f32.xlu0 %v581
      %v583 = vpop.xlane.xlu0 %582
      %v584 = vsub.f32 %v420, %v574
      %v585 = vsub.f32 %v469, %v577
      %v586 = vsub.f32 %v518, %v580
      %v587 = vsub.f32 %v567, %v583
      %v588 = vmul.f32 %v584, 1.442695
      %v589 = vpow.pop %v588
      %v590 = vmul.f32 %v585, 1.442695
      %v591 = vpow.pop %v590
      %v592 = vmul.f32 %v586, 1.442695
      %v593 = vpow.pop %v592
      %v594 = vmul.f32 %v587, 1.442695
      %v595 = vpow.pop %v594
      %v596 = vsel %vm378, %v589, 0.0
      %597 = vadd.xlane.f32.xlu0 %v596
      %v598 = vpop.xlane.xlu0 %597
      %v599 = vsel %vm378, %v591, 0.0
      %600 = vadd.xlane.f32.xlu0 %v599
      %v601 = vpop.xlane.xlu0 %600
      %v602 = vsel %vm378, %v593, 0.0
      %603 = vadd.xlane.f32.xlu0 %v602
      %v604 = vpop.xlane.xlu0 %603
      %v605 = vsel %vm378, %v595, 0.0
      %606 = vadd.xlane.f32.xlu0 %v605
      %v607 = vpop.xlane.xlu0 %606
      %v608 = vrcp.pop %v598
      %v609 = vrcp.pop %v601
      %v610 = vrcp.pop %v604
      %v611 = vrcp.pop %v607
      %v612 = vmul.f32 %v589, %v608
      %v613 = vmul.f32 %v591, %v609
      %v614 = vmul.f32 %v593, %v610
      %v615 = vmul.f32 %v595, %v611
      %v616 = vpack.c.bf16 %v612, %v612
      %v617 = vpack.c.bf16 %v613, %v613
      %v618 = vpack.c.bf16 %v614, %v614
      %v619 = vpack.c.bf16 %v615, %v615
      %620 = vrot.lane.b32.xlu0 %v371, 64
      %v621 = vpop.permute.xlu0 %620
      %v623 = vsel %vm378, %v616, 0
      %vm625 = vcmask 1043456
      %v627 = vsel %vm625, %v621, 0
      %629 = vmatprep.subr.bf16.mxu0 0
      %630 = vmatpush1.bf16.msra.mxu0 0
      %631 = vmatprep.subr.bf16.mxu0 0
      %632 = vmatpush1.bf16.msra.mxu0 0
      %633 = vmatprep.subr.bf16.mxu0 0
      %634 = vmatpush1.bf16.msra.mxu0 0
      %635 = vmatprep.subr.bf16.mxu0 0
      %636 = vmatpush1.bf16.msra.mxu0 0
      %637 = vmatprep.subr.bf16.mxu0 0
      %638 = vmatpush1.bf16.msra.mxu0 0
      %639 = vmatprep.subr.bf16.mxu0 0
      %640 = vmatpush1.bf16.msra.mxu0 0
      %641 = vmatprep.subr.bf16.mxu0 0
      %642 = vmatpush1.bf16.msra.mxu0 0
      %643 = vmatprep.subr.bf16.mxu0 0
      %644 = vmatpush1.bf16.msra.mxu0 %v627
      %645 = vmatprep.subr.bf16.mxu0 0
      %646 = vmatpush2.bf16.msra.mxu0 0
      %647 = vmatprep.subr.bf16.mxu0 0
      %648 = vmatpush2.bf16.msra.mxu0 0
      %649 = vmatprep.subr.bf16.mxu0 0
      %650 = vmatpush2.bf16.msra.mxu0 0
      %651 = vmatprep.subr.bf16.mxu0 0
      %652 = vmatpush2.bf16.msra.mxu0 0
      %653 = vmatprep.subr.bf16.mxu0 0
      %654 = vmatpush2.bf16.msra.mxu0 0
      %655 = vmatprep.subr.bf16.mxu0 0
      %656 = vmatpush2.bf16.msra.mxu0 0
      %657 = vmatprep.subr.bf16.mxu0 0
      %658 = vmatpush2.bf16.msra.mxu0 0
      %659 = vmatprep.subr.bf16.mxu0 0
      %660 = vmatpush2.bf16.msra.mxu0 0
      %661 = vmatprep.mubr.bf16.mxu0 0
      %662 = vmatmul.mubr.bf16.gmra.mxu0 %v623
      %v663 = vpop.f32.mrf.mxu0
      %v664 = vadd.f32 0.0, %v663
      %v665 = vpop.f32.mrf.mxu0
      %v666 = vpop.f32.mrf.mxu0
      %v667 = vpop.f32.mrf.mxu0
      %668 = vdwg.mxu0
      %669 = vrot.lane.b32.xlu0 %v372, 64
      %v670 = vpop.permute.xlu0 %669
      %v672 = vsel %vm378, %v617, 0
      %v675 = vsel %vm625, %v670, 0
      %677 = vmatprep.subr.bf16.mxu0 0
      %678 = vmatpush1.bf16.msra.mxu0 0
      %679 = vmatprep.subr.bf16.mxu0 0
      %680 = vmatpush1.bf16.msra.mxu0 0
      %681 = vmatprep.subr.bf16.mxu0 0
      %682 = vmatpush1.bf16.msra.mxu0 0
      %683 = vmatprep.subr.bf16.mxu0 0
      %684 = vmatpush1.bf16.msra.mxu0 0
      %685 = vmatprep.subr.bf16.mxu0 0
      %686 = vmatpush1.bf16.msra.mxu0 0
      %687 = vmatprep.subr.bf16.mxu0 0
      %688 = vmatpush1.bf16.msra.mxu0 0
      %689 = vmatprep.subr.bf16.mxu0 0
      %690 = vmatpush1.bf16.msra.mxu0 0
      %691 = vmatprep.subr.bf16.mxu0 0
      %692 = vmatpush1.bf16.msra.mxu0 %v675
      %693 = vmatprep.subr.bf16.mxu0 0
      %694 = vmatpush2.bf16.msra.mxu0 0
      %695 = vmatprep.subr.bf16.mxu0 0
      %696 = vmatpush2.bf16.msra.mxu0 0
      %697 = vmatprep.subr.bf16.mxu0 0
      %698 = vmatpush2.bf16.msra.mxu0 0
      %699 = vmatprep.subr.bf16.mxu0 0
      %700 = vmatpush2.bf16.msra.mxu0 0
      %701 = vmatprep.subr.bf16.mxu0 0
      %702 = vmatpush2.bf16.msra.mxu0 0
      %703 = vmatprep.subr.bf16.mxu0 0
      %704 = vmatpush2.bf16.msra.mxu0 0
      %705 = vmatprep.subr.bf16.mxu0 0
      %706 = vmatpush2.bf16.msra.mxu0 0
      %707 = vmatprep.subr.bf16.mxu0 0
      %708 = vmatpush2.bf16.msra.mxu0 0
      %709 = vmatprep.mubr.bf16.mxu0 0
      %710 = vmatmul.mubr.bf16.gmra.mxu0 %v672
      %v711 = vpop.f32.mrf.mxu0
      %v712 = vadd.f32 0.0, %v711
      %v713 = vpop.f32.mrf.mxu0
      %v714 = vpop.f32.mrf.mxu0
      %v715 = vpop.f32.mrf.mxu0
      %716 = vdwg.mxu0
      %717 = vrot.lane.b32.xlu0 %v373, 64
      %v718 = vpop.permute.xlu0 %717
      %v720 = vsel %vm378, %v618, 0
      %v723 = vsel %vm625, %v718, 0
      %725 = vmatprep.subr.bf16.mxu0 0
      %726 = vmatpush1.bf16.msra.mxu0 0
      %727 = vmatprep.subr.bf16.mxu0 0
      %728 = vmatpush1.bf16.msra.mxu0 0
      %729 = vmatprep.subr.bf16.mxu0 0
      %730 = vmatpush1.bf16.msra.mxu0 0
      %731 = vmatprep.subr.bf16.mxu0 0
      %732 = vmatpush1.bf16.msra.mxu0 0
      %733 = vmatprep.subr.bf16.mxu0 0
      %734 = vmatpush1.bf16.msra.mxu0 0
      %735 = vmatprep.subr.bf16.mxu0 0
      %736 = vmatpush1.bf16.msra.mxu0 0
      %737 = vmatprep.subr.bf16.mxu0 0
      %738 = vmatpush1.bf16.msra.mxu0 0
      %739 = vmatprep.subr.bf16.mxu0 0
      %740 = vmatpush1.bf16.msra.mxu0 %v723
      %741 = vmatprep.subr.bf16.mxu0 0
      %742 = vmatpush2.bf16.msra.mxu0 0
      %743 = vmatprep.subr.bf16.mxu0 0
      %744 = vmatpush2.bf16.msra.mxu0 0
      %745 = vmatprep.subr.bf16.mxu0 0
      %746 = vmatpush2.bf16.msra.mxu0 0
      %747 = vmatprep.subr.bf16.mxu0 0
      %748 = vmatpush2.bf16.msra.mxu0 0
      %749 = vmatprep.subr.bf16.mxu0 0
      %750 = vmatpush2.bf16.msra.mxu0 0
      %751 = vmatprep.subr.bf16.mxu0 0
      %752 = vmatpush2.bf16.msra.mxu0 0
      %753 = vmatprep.subr.bf16.mxu0 0
      %754 = vmatpush2.bf16.msra.mxu0 0
      %755 = vmatprep.subr.bf16.mxu0 0
      %756 = vmatpush2.bf16.msra.mxu0 0
      %757 = vmatprep.mubr.bf16.mxu0 0
      %758 = vmatmul.mubr.bf16.gmra.mxu0 %v720
      %v759 = vpop.f32.mrf.mxu0
      %v760 = vadd.f32 0.0, %v759
      %v761 = vpop.f32.mrf.mxu0
      %v762 = vpop.f32.mrf.mxu0
      %v763 = vpop.f32.mrf.mxu0
      %764 = vdwg.mxu0
      %765 = vrot.lane.b32.xlu0 %v374, 64
      %v766 = vpop.permute.xlu0 %765
      %v768 = vsel %vm378, %v619, 0
      %v771 = vsel %vm625, %v766, 0
      %773 = vmatprep.subr.bf16.mxu0 0
      %774 = vmatpush1.bf16.msra.mxu0 0
      %775 = vmatprep.subr.bf16.mxu0 0
      %776 = vmatpush1.bf16.msra.mxu0 0
      %777 = vmatprep.subr.bf16.mxu0 0
      %778 = vmatpush1.bf16.msra.mxu0 0
      %779 = vmatprep.subr.bf16.mxu0 0
      %780 = vmatpush1.bf16.msra.mxu0 0
      %781 = vmatprep.subr.bf16.mxu0 0
      %782 = vmatpush1.bf16.msra.mxu0 0
      %783 = vmatprep.subr.bf16.mxu0 0
      %784 = vmatpush1.bf16.msra.mxu0 0
      %785 = vmatprep.subr.bf16.mxu0 0
      %786 = vmatpush1.bf16.msra.mxu0 0
      %787 = vmatprep.subr.bf16.mxu0 0
      %788 = vmatpush1.bf16.msra.mxu0 %v771
      %789 = vmatprep.subr.bf16.mxu0 0
      %790 = vmatpush2.bf16.msra.mxu0 0
      %791 = vmatprep.subr.bf16.mxu0 0
      %792 = vmatpush2.bf16.msra.mxu0 0
      %793 = vmatprep.subr.bf16.mxu0 0
      %794 = vmatpush2.bf16.msra.mxu0 0
      %795 = vmatprep.subr.bf16.mxu0 0
      %796 = vmatpush2.bf16.msra.mxu0 0
      %797 = vmatprep.subr.bf16.mxu0 0
      %798 = vmatpush2.bf16.msra.mxu0 0
      %799 = vmatprep.subr.bf16.mxu0 0
      %800 = vmatpush2.bf16.msra.mxu0 0
      %801 = vmatprep.subr.bf16.mxu0 0
      %802 = vmatpush2.bf16.msra.mxu0 0
      %803 = vmatprep.subr.bf16.mxu0 0
      %804 = vmatpush2.bf16.msra.mxu0 0
      %805 = vmatprep.mubr.bf16.mxu0 0
      %806 = vmatmul.mubr.bf16.gmra.mxu0 %v768
      %v807 = vpop.f32.mrf.mxu0
      %v808 = vadd.f32 0.0, %v807
      %v809 = vpop.f32.mrf.mxu0
      %v810 = vpop.f32.mrf.mxu0
      %v811 = vpop.f32.mrf.mxu0
      %812 = vdwg.mxu0
      %814 = vrot.lane.b32.xlu0 %v712, 8
      %v815 = vpop.permute.xlu0 %814
      %818 = vrot.lane.b32.xlu0 %v760, 16
      %v819 = vpop.permute.xlu0 %818
      %822 = vrot.lane.b32.xlu0 %v808, 24
      %v823 = vpop.permute.xlu0 %822
      %v825 = vsel %vm378, %v664, %v815
      %vm826 = vcmask 130048
      %v827 = vsel %vm826, %v825, %v819
      %vm828 = vcmask 195584
      %v829 = vsel %vm828, %v827, %v823
      %v830 = vpack.c.bf16 %v829, %v829
      %v831 = vld [vmem:[%s3] sm:$0xf]
      %v832 = vld [vmem:[%s3 + $0x4] sm:$0xf]
      %v833 = vld [vmem:[%s3 + $0x8] sm:$0xf]
      %v834 = vld [vmem:[%s3 + $0xc] sm:$0xf]
      %v835 = vlaneseq
      %v836 = vshrl.u32 %v835, 7
      %v837 = vsub.s32 0, %v836
      %v838 = vrot.slane %v252, %v837
      %v843 = vunpack.c.l.b16 %v831
      %v844 = vunpack.c.l.b16 %v832
      %v845 = vunpack.c.l.b16 %v833
      %v846 = vunpack.c.l.b16 %v834
      %v847 = vpack.c.b16 %v844, %v843
      %v848 = vpack.c.b16 %v846, %v845
      %v852 = vsel %vm257, %v830, 0
      %854 = vmatprep.subr.bf16.mxu0 0
      %855 = vmatpush1.bf16.msra.mxu0 0
      %856 = vmatprep.subr.bf16.mxu0 0
      %857 = vmatpush1.bf16.msra.mxu0 0
      %858 = vmatprep.subr.bf16.mxu0 0
      %859 = vmatpush1.bf16.msra.mxu0 0
      %860 = vmatprep.subr.bf16.mxu0 0
      %861 = vmatpush1.bf16.msra.mxu0 0
      %862 = vmatprep.subr.bf16.mxu0 0
      %863 = vmatpush1.bf16.msra.mxu0 0
      %864 = vmatprep.subr.bf16.mxu0 0
      %865 = vmatpush1.bf16.msra.mxu0 0
      %866 = vmatprep.subr.bf16.mxu0 0
      %867 = vmatpush1.bf16.msra.mxu0 %v848
      %868 = vmatprep.subr.bf16.mxu0 0
      %869 = vmatpush1.bf16.msra.mxu0 %v847
      %870 = vmatprep.subr.bf16.mxu0 0
      %871 = vmatpush2.bf16.msra.mxu0 0
      %872 = vmatprep.subr.bf16.mxu0 0
      %873 = vmatpush2.bf16.msra.mxu0 0
      %874 = vmatprep.subr.bf16.mxu0 0
      %875 = vmatpush2.bf16.msra.mxu0 0
      %876 = vmatprep.subr.bf16.mxu0 0
      %877 = vmatpush2.bf16.msra.mxu0 0
      %878 = vmatprep.subr.bf16.mxu0 0
      %879 = vmatpush2.bf16.msra.mxu0 0
      %880 = vmatprep.subr.bf16.mxu0 0
      %881 = vmatpush2.bf16.msra.mxu0 0
      %882 = vmatprep.subr.bf16.mxu0 0
      %883 = vmatpush2.bf16.msra.mxu0 0
      %884 = vmatprep.subr.bf16.mxu0 0
      %885 = vmatpush2.bf16.msra.mxu0 0
      %886 = vmatprep.mubr.bf16.mxu0 0
      %887 = vmatmul.mubr.bf16.gmra.mxu0 %v852
      %v888 = vpop.f32.mrf.mxu0
      %v889 = vadd.f32 %v838, %v888
      %v890 = vpop.f32.mrf.mxu0
      %v891 = vpop.f32.mrf.mxu0
      %v892 = vpop.f32.mrf.mxu0
      %893 = vdwg.mxu0
      %v894 = vadd.f32 %v248, %v889
      %v895 = vsel %vm257, %v894, 0.0
      %896 = vadd.xlane.f32.xlu0 %v895
      %v897 = vpop.xlane.xlu0 %896
      %v898 = vmul.f32 %v897, %v261
      %v899 = vsub.f32 %v894, %v898
      %v900 = vmul.f32 %v899, %v899
      %v901 = vsel %vm257, %v900, 0.0
      %902 = vadd.xlane.f32.xlu0 %v901
      %v903 = vpop.xlane.xlu0 %902
      %v904 = vmul.f32 %v903, %v261
      %v905 = vadd.f32 %v904, 1e-05
      %v906 = vrsqrt.pop %v905
      %v907 = vmul.f32 %v899, %v906
      %v908 = vlaneseq
      %v909 = vshrl.u32 %v908, 7
      %v910 = vsub.s32 0, %v909
      %v911 = vrot.slane %v253, %v910
      %v912 = vmul.f32 %v907, %v911
      %v913 = vlaneseq
      %v914 = vshrl.u32 %v913, 7
      %v915 = vsub.s32 0, %v914
      %v916 = vrot.slane %v254, %v915
      %v917 = vadd.f32 %v912, %v916
      %v918 = vpack.c.bf16 %v917, %v917
      %v919 = vld [vmem:[%s4] sm:$0xf]
      %v920 = vld [vmem:[%s4 + $0x4] sm:$0xf]
      %v921 = vld [vmem:[%s4 + $0x8] sm:$0xf]
      %v922 = vld [vmem:[%s4 + $0xc] sm:$0xf]
      %v923 = vlaneseq
      %v924 = vshrl.u32 %v923, 7
      %v925 = vsub.s32 0, %v924
      %v926 = vrot.slane %v255, %v925
      %v931 = vunpack.c.l.b16 %v919
      %v932 = vunpack.c.l.b16 %v920
      %v933 = vunpack.c.l.b16 %v921
      %v934 = vunpack.c.l.b16 %v922
      %v935 = vpack.c.b16 %v932, %v931
      %v936 = vpack.c.b16 %v934, %v933
      %v940 = vsel %vm257, %v918, 0
      %942 = vmatprep.subr.bf16.mxu0 0
      %943 = vmatpush1.bf16.msra.mxu0 0
      %944 = vmatprep.subr.bf16.mxu0 0
      %945 = vmatpush1.bf16.msra.mxu0 0
      %946 = vmatprep.subr.bf16.mxu0 0
      %947 = vmatpush1.bf16.msra.mxu0 0
      %948 = vmatprep.subr.bf16.mxu0 0
      %949 = vmatpush1.bf16.msra.mxu0 0
      %950 = vmatprep.subr.bf16.mxu0 0
      %951 = vmatpush1.bf16.msra.mxu0 0
      %952 = vmatprep.subr.bf16.mxu0 0
      %953 = vmatpush1.bf16.msra.mxu0 0
      %954 = vmatprep.subr.bf16.mxu0 0
      %955 = vmatpush1.bf16.msra.mxu0 %v936
      %956 = vmatprep.subr.bf16.mxu0 0
      %957 = vmatpush1.bf16.msra.mxu0 %v935
      %958 = vmatprep.subr.bf16.mxu0 0
      %959 = vmatpush2.bf16.msra.mxu0 0
      %960 = vmatprep.subr.bf16.mxu0 0
      %961 = vmatpush2.bf16.msra.mxu0 0
      %962 = vmatprep.subr.bf16.mxu0 0
      %963 = vmatpush2.bf16.msra.mxu0 0
      %964 = vmatprep.subr.bf16.mxu0 0
      %965 = vmatpush2.bf16.msra.mxu0 0
      %966 = vmatprep.subr.bf16.mxu0 0
      %967 = vmatpush2.bf16.msra.mxu0 0
      %968 = vmatprep.subr.bf16.mxu0 0
      %969 = vmatpush2.bf16.msra.mxu0 0
      %970 = vmatprep.subr.bf16.mxu0 0
      %971 = vmatpush2.bf16.msra.mxu0 0
      %972 = vmatprep.subr.bf16.mxu0 0
      %973 = vmatpush2.bf16.msra.mxu0 0
      %974 = vmatprep.mubr.bf16.mxu0 0
      %975 = vmatmul.mubr.bf16.gmra.mxu0 %v940
      %v976 = vpop.f32.mrf.mxu0
      %v977 = vadd.f32 %v926, %v976
      %v978 = vpop.f32.mrf.mxu0
      %v979 = vpop.f32.mrf.mxu0
      %v980 = vpop.f32.mrf.mxu0
      %981 = vdwg.mxu0
      %v982 = vmax.f32 %v977, 0.0
      %v983 = vpack.c.bf16 %v982, %v982
      %v984 = vld [vmem:[%s5] sm:$0xf]
      %v985 = vld [vmem:[%s5 + $0x4] sm:$0xf]
      %v986 = vld [vmem:[%s5 + $0x8] sm:$0xf]
      %v987 = vld [vmem:[%s5 + $0xc] sm:$0xf]
      %v988 = vld [vmem:[%s5 + $0x10] sm:$0xf]
      %v989 = vld [vmem:[%s5 + $0x14] sm:$0xf]
      %v990 = vld [vmem:[%s5 + $0x18] sm:$0xf]
      %v991 = vld [vmem:[%s5 + $0x1c] sm:$0xf]
      %v992 = vld [vmem:[%s5 + $0x20] sm:$0xf]
      %v993 = vld [vmem:[%s5 + $0x24] sm:$0xf]
      %v994 = vld [vmem:[%s5 + $0x28] sm:$0xf]
      %v995 = vld [vmem:[%s5 + $0x2c] sm:$0xf]
      %v996 = vld [vmem:[%s5 + $0x30] sm:$0xf]
      %v997 = vld [vmem:[%s5 + $0x34] sm:$0xf]
      %v998 = vld [vmem:[%s5 + $0x38] sm:$0xf]
      %v999 = vld [vmem:[%s5 + $0x3c] sm:$0xf]
      %v1000 = vlaneseq
      %v1001 = vshrl.u32 %v1000, 7
      %v1002 = vsub.s32 0, %v1001
      %v1003 = vrot.slane %v256, %v1002
      %v1020 = vunpack.c.l.b16 %v984
      %v1021 = vunpack.c.l.b16 %v985
      %v1022 = vunpack.c.l.b16 %v986
      %v1023 = vunpack.c.l.b16 %v987
      %v1024 = vunpack.c.l.b16 %v988
      %v1025 = vunpack.c.l.b16 %v989
      %v1026 = vunpack.c.l.b16 %v990
      %v1027 = vunpack.c.l.b16 %v991
      %v1028 = vunpack.c.l.b16 %v992
      %v1029 = vunpack.c.l.b16 %v993
      %v1030 = vunpack.c.l.b16 %v994
      %v1031 = vunpack.c.l.b16 %v995
      %v1032 = vunpack.c.l.b16 %v996
      %v1033 = vunpack.c.l.b16 %v997
      %v1034 = vunpack.c.l.b16 %v998
      %v1035 = vunpack.c.l.b16 %v999
      %v1036 = vpack.c.b16 %v1021, %v1020
      %v1037 = vpack.c.b16 %v1023, %v1022
      %v1038 = vpack.c.b16 %v1025, %v1024
      %v1039 = vpack.c.b16 %v1027, %v1026
      %v1040 = vpack.c.b16 %v1029, %v1028
      %v1041 = vpack.c.b16 %v1031, %v1030
      %v1042 = vpack.c.b16 %v1033, %v1032
      %v1043 = vpack.c.b16 %v1035, %v1034
      %1052 = vmatprep.subr.bf16.mxu0 0
      %1053 = vmatpush1.bf16.msra.mxu0 %v1043
      %1054 = vmatprep.subr.bf16.mxu0 0
      %1055 = vmatpush1.bf16.msra.mxu0 %v1042
      %1056 = vmatprep.subr.bf16.mxu0 0
      %1057 = vmatpush1.bf16.msra.mxu0 %v1041
      %1058 = vmatprep.subr.bf16.mxu0 0
      %1059 = vmatpush1.bf16.msra.mxu0 %v1040
      %1060 = vmatprep.subr.bf16.mxu0 0
      %1061 = vmatpush1.bf16.msra.mxu0 %v1039
      %1062 = vmatprep.subr.bf16.mxu0 0
      %1063 = vmatpush1.bf16.msra.mxu0 %v1038
      %1064 = vmatprep.subr.bf16.mxu0 0
      %1065 = vmatpush1.bf16.msra.mxu0 %v1037
      %1066 = vmatprep.subr.bf16.mxu0 0
      %1067 = vmatpush1.bf16.msra.mxu0 %v1036
      %1068 = vmatprep.subr.bf16.mxu0 0
      %1069 = vmatpush2.bf16.msra.mxu0 0
      %1070 = vmatprep.subr.bf16.mxu0 0
      %1071 = vmatpush2.bf16.msra.mxu0 0
      %1072 = vmatprep.subr.bf16.mxu0 0
      %1073 = vmatpush2.bf16.msra.mxu0 0
      %1074 = vmatprep.subr.bf16.mxu0 0
      %1075 = vmatpush2.bf16.msra.mxu0 0
      %1076 = vmatprep.subr.bf16.mxu0 0
      %1077 = vmatpush2.bf16.msra.mxu0 0
      %1078 = vmatprep.subr.bf16.mxu0 0
      %1079 = vmatpush2.bf16.msra.mxu0 0
      %1080 = vmatprep.subr.bf16.mxu0 0
      %1081 = vmatpush2.bf16.msra.mxu0 0
      %1082 = vmatprep.subr.bf16.mxu0 0
      %1083 = vmatpush2.bf16.msra.mxu0 0
      %1084 = vmatprep.mubr.bf16.mxu0 0
      %1085 = vmatmul.mubr.bf16.gmra.mxu0 %v983
      %v1086 = vpop.f32.mrf.mxu0
      %v1087 = vadd.f32 %v1003, %v1086
      %v1088 = vpop.f32.mrf.mxu0
      %v1089 = vpop.f32.mrf.mxu0
      %v1090 = vpop.f32.mrf.mxu0
      %1091 = vdwg.mxu0
      %v1092 = vadd.f32 %v894, %v1087
      %1093 = vst.msk [vmem:[%s246] sm:$0xff] %vm257, %v1092
      %p1094 = scmp.lt.s32.totalorder %s17, 1
      %s1095 = scalar_select %p1094, %s17, 1
      %s1096 = smul.addr %s1095, 8
      %s1097 = scalar_lea.vmem %s6, %s1096
      // Predicated region
      $region45: #{transformer_block.1} parent=43 // pred_check
        %p1098 = pneg %p166
      $region46: #{transformer_block.1} parent=43 // pred_check_branch
        %1100 = sbr.rel (%p1098) target = $region48
      $region47: #{transformer_block.1} parent=43 // pred_region
        _
      $region48: #{transformer_block.1} parent=43 // pred_fallthru
        _
    $region44: #{transformer_block.1} parent=5 // pred_fallthru
      _
    %p1101 = scmp.le.s32.totalorder 2, %s12
    // Predicated region
    $region49: #{transformer_block.1} parent=5 // pred_check
      %p1102 = pneg %p1101
    $region50: #{transformer_block.1} parent=5 // pred_check_branch
      %1104 = sbr.rel (%p1102) target = $region52
    $region51: #{transformer_block.1} parent=5 // pred_region
      %s1105 = ssub.s32 %s12, 2
      // Predicated region
      $region53: #{transformer_block.1} parent=51 // pred_check
        %p1106 = pneg %p172
      $region54: #{transformer_block.1} parent=51 // pred_check_branch
        %1108 = sbr.rel (%p1106) target = $region56
      $region55: #{transformer_block.1} parent=51 // pred_region
        %p1109 = scmp.lt.s32.totalorder %s18, 1
        %s1110 = scalar_select %p1109, %s18, 1
        %s1111 = smul.addr %s1110, 8
        %s1112 = scalar_lea.vmem %s6, %s1111
      $region56: #{transformer_block.1} parent=51 // pred_fallthru
        _
    $region52: #{transformer_block.1} parent=5 // pred_fallthru
      _
  $region6: #{transformer_block.1} parent=0 // loop_footer
    %s16 = sadd.s32 1, %s12
  $region7: #{transformer_block.1} parent=0 // loop_footer_branch
    %11 = sbr.rel target = $region3
  $region8: #{transformer_block.1} parent=0 // loop_exit
    _

</llo_original>
